<compile_context>
chip_gen: v7x
topology: tpu7x:2x2x1
jax: 0.10.0
libtpu: 0.0.40
codegen_flags: <defaults>
</compile_context>

<pallas_src>
import jax
import jax.numpy as jnp
from jax.experimental import pallas as pl
from jax.experimental.pallas import tpu as pltpu

N_EMBD = 10
HIDDEN = 4 * N_EMBD
DROPOUT = 0.2  # eval-mode: identity.
# TODO(synk): train-mode dropout would need pltpu.prng_seed + prng_random_bits inside the kernel.

LANE = 128      # TPU lane width; hidden dim of the resident weights is padded to this.
MAX_TM = 2048   # max token rows per grid step.


def _round_up(x, m):
    return (x + m - 1) // m * m


def _ffn_kernel(x_ref, w1_ref, b1_ref, w2_ref, b2_ref, o_ref):
    # One token tile per grid step; weights/biases are VMEM-resident across the
    # whole grid (constant index_map).  Two MXU matmuls with f32 accumulation,
    # VPU bias-add + ReLU in f32.  The [tm, 128] f32 intermediate h lives in a
    # Mosaic VMEM temp for large tm (budgeted in vmem_limit_bytes).
    x = x_ref[...]                                                    # [TM, 10]
    h = jnp.dot(x, w1_ref[...], preferred_element_type=jnp.float32)  # [TM, 128] f32
    h = jnp.maximum(h + b1_ref[...], 0.0)                             # bias + ReLU (f32, VPU)
    y = jnp.dot(h.astype(w2_ref.dtype), w2_ref[...],
                preferred_element_type=jnp.float32)                   # [TM, 10] f32
    # Dropout in eval mode is identity (p=0.2 only active in training).
    o_ref[...] = (y + b2_ref[...]).astype(o_ref.dtype)


def prepare_params(w1, b1, w2, b2):
    """One-time parameter prep: pad the hidden dim to a full 128-lane width.

    Padding is a mathematical no-op (padded w1 columns / b1 entries are zero,
    so padded h columns are relu(0) = 0, and padded w2 rows are zero).
    Call once at init, not per forward pass.
    """
    n_in, hidden = w1.shape
    d_h = _round_up(hidden, LANE)
    w1_p = jnp.pad(w1, ((0, 0), (0, d_h - hidden)))          # [10, 128]
    b1_p = jnp.pad(b1, (0, d_h - hidden)).reshape(1, d_h)     # [1, 128]
    w2_p = jnp.pad(w2, ((0, d_h - hidden), (0, 0)))           # [128, 10]
    b2_p = b2.reshape(1, n_in)                                 # [1, 10]
    return w1_p, b1_p, w2_p, b2_p


def feed_forward(x, w1_p, b1_p, w2_p, b2_p, *, matmul_dtype=None):
    """x: [..., n_embd] float32; params from prepare_params().

    matmul_dtype: optional narrower dtype (e.g. jnp.bfloat16) for x/weights on
    the DMA + MXU path; accumulation, bias+ReLU, and the output stay float32.
    Returns same shape/dtype as x.
    """
    orig_shape = x.shape
    orig_dtype = x.dtype
    n_embd = orig_shape[-1]
    d_h = w1_p.shape[1]

    tokens = 1
    for d in orig_shape[:-1]:
        tokens *= d
    x2d = x.reshape(tokens, n_embd)

    if matmul_dtype is not None:
        x2d = x2d.astype(matmul_dtype)
        w1_p = w1_p.astype(matmul_dtype)
        w2_p = w2_p.astype(matmul_dtype)

    in_item = jnp.dtype(x2d.dtype).itemsize
    out_item = jnp.dtype(orig_dtype).itemsize
    sub = 8 if in_item >= 4 else (16 if in_item == 2 else 32)  # sublane packing

    # Token tile: multiple of the sublane packing; big to amortize per-step
    # overhead, but capped so large inputs get >= 4 grid steps (so the
    # "parallel" token axis can shard across both v7x TensorCores).
    tm = _round_up(tokens, sub)
    if tm > MAX_TM:
        tm = min(MAX_TM, _round_up((tokens + 3) // 4, sub))
    padded_tokens = _round_up(tokens, tm)
    grid = (padded_tokens // tm,)

    if padded_tokens != tokens:
        # Row (sublane) padding only; feature lanes stay unpadded in HBM.
        x2d = jnp.pad(x2d, ((0, padded_tokens - tokens), (0, 0)))

    # VMEM budget: double-buffered x/out tiles + (double-buffered) resident
    # weights/biases + the [tm, d_h] f32 intermediate, plus headroom for
    # Mosaic-internal scratch.
    io_bytes = 2 * tm * n_embd * (in_item + out_item)
    w_bytes = 2 * ((n_embd * d_h + d_h * n_embd) * in_item + (d_h + n_embd) * 4)
    h_bytes = tm * d_h * 4
    vmem_limit = max(int(1.5 * (io_bytes + w_bytes + h_bytes)), 4 * 1024 * 1024)

    out = pl.pallas_call(
        _ffn_kernel,
        out_shape=jax.ShapeDtypeStruct((padded_tokens, n_embd), orig_dtype),
        grid=grid,
        in_specs=[
            pl.BlockSpec((tm, n_embd), lambda i: (i, 0)),    # x tile (unpadded lanes), pipelined
            pl.BlockSpec((n_embd, d_h), lambda i: (0, 0)),   # w1 [10, 128], resident
            pl.BlockSpec((1, d_h), lambda i: (0, 0)),        # b1 [1, 128], resident
            pl.BlockSpec((d_h, n_embd), lambda i: (0, 0)),   # w2 [128, 10], resident
            pl.BlockSpec((1, n_embd), lambda i: (0, 0)),     # b2 [1, 10], resident
        ],
        out_specs=pl.BlockSpec((tm, n_embd), lambda i: (i, 0)),
        compiler_params=pltpu.CompilerParams(
            dimension_semantics=("parallel",),
            vmem_limit_bytes=int(vmem_limit),
        ),
    )(x2d, w1_p, b1_p, w2_p, b2_p)

    if padded_tokens != tokens:
        out = out[:tokens]
    return out.reshape(orig_shape)


def init_params(key):
    """Deterministic init mimicking nn.Linear's uniform(-1/sqrt(fan_in), 1/sqrt(fan_in))."""
    k1, k2, k3, k4 = jax.random.split(key, 4)
    bound1 = 1.0 / jnp.sqrt(jnp.float32(N_EMBD))
    bound2 = 1.0 / jnp.sqrt(jnp.float32(HIDDEN))
    w1 = jax.random.uniform(k1, (N_EMBD, HIDDEN), jnp.float32, -bound1, bound1)
    b1 = jax.random.uniform(k2, (HIDDEN,), jnp.float32, -bound1, bound1)
    w2 = jax.random.uniform(k3, (HIDDEN, N_EMBD), jnp.float32, -bound2, bound2)
    b2 = jax.random.uniform(k4, (N_EMBD,), jnp.float32, -bound2, bound2)
    return w1, b1, w2, b2


if __name__ == "__main__":
    key = jax.random.PRNGKey(0)
    kx, kp = jax.random.split(key)

    batch, seq = 2, 8
    x = jax.random.normal(kx, (batch, seq, N_EMBD), jnp.float32)
    w1, b1, w2, b2 = init_params(kp)
    params = prepare_params(w1, b1, w2, b2)   # padded once at init

    # f32 path: bit-comparable to the PyTorch module in eval mode.
    out = jax.block_until_ready(feed_forward(x, *params))
    ref = jnp.maximum(x @ w1 + b1, 0.0) @ w2 + b2
    assert out.shape == x.shape and out.dtype == x.dtype
    assert jnp.allclose(out, ref, atol=1e-5, rtol=1e-5)

    # bf16-input / f32-accumulate path (halves HBM bytes; v6e/v7x fast MXU path).
    out_bf16 = jax.block_until_ready(
        feed_forward(x, *params, matmul_dtype=jnp.bfloat16))
    assert out_bf16.shape == x.shape and out_bf16.dtype == x.dtype
    assert jnp.allclose(out_bf16, ref, atol=1e-1, rtol=1e-2)

    print("KERNEL_OK")
</pallas_src>

<mosaic_0001>
module attributes {stable_mosaic.version = 11 : i64} {
  func.func @_ffn_kernel(%arg0: i32, %arg1: memref<16x10xf32, #tpu.memory_space<vmem>>, %arg2: memref<10x128xf32, #tpu.memory_space<vmem>>, %arg3: memref<1x128xf32, #tpu.memory_space<vmem>>, %arg4: memref<128x10xf32, #tpu.memory_space<vmem>>, %arg5: memref<1x10xf32, #tpu.memory_space<vmem>>, %arg6: memref<16x10xf32, #tpu.memory_space<vmem>>) attributes {dimension_semantics = [#tpu.dimension_semantics<parallel>], iteration_bounds = array<i64: 1>, scalar_prefetch = 0 : i64, scratch_operands = 0 : i64, tpu.core_type = #tpu.core_type<tc>, window_params = [{transform_indices = @transform_0, window_bounds = array<i64: 16, 10>}, {pipeline_mode = #tpu.pipeline_mode<synchronous>, transform_indices = @transform_1, window_bounds = array<i64: 10, 128>}, {pipeline_mode = #tpu.pipeline_mode<synchronous>, transform_indices = @transform_2, window_bounds = array<i64: 1, 128>}, {pipeline_mode = #tpu.pipeline_mode<synchronous>, transform_indices = @transform_3, window_bounds = array<i64: 128, 10>}, {pipeline_mode = #tpu.pipeline_mode<synchronous>, transform_indices = @transform_4, window_bounds = array<i64: 1, 10>}, {transform_indices = @transform_5, window_bounds = array<i64: 16, 10>}]} {
    %c0 = arith.constant 0 : index
    %c0_0 = arith.constant 0 : index
    %0 = vector.load %arg1[%c0, %c0_0] : memref<16x10xf32, #tpu.memory_space<vmem>>, vector<16x10xf32>
    %c0_1 = arith.constant 0 : index
    %c0_2 = arith.constant 0 : index
    %1 = vector.load %arg2[%c0_1, %c0_2] : memref<10x128xf32, #tpu.memory_space<vmem>>, vector<10x128xf32>
    %cst = arith.constant dense<0.000000e+00> : vector<16x128xf32>
    %2 = tpu.matmul %0, %1, %cst {dimension_numbers = #tpu.dot_dimension_numbers<[1], [0], [0], [1], [0, 0, 1, 1], [], []>} : vector<16x10xf32>, vector<10x128xf32>, vector<16x128xf32> -> vector<16x128xf32>
    %c0_3 = arith.constant 0 : index
    %c0_4 = arith.constant 0 : index
    %3 = vector.load %arg3[%c0_3, %c0_4] : memref<1x128xf32, #tpu.memory_space<vmem>>, vector<1x128xf32>
    %4 = vector.broadcast %3 : vector<1x128xf32> to vector<16x128xf32>
    %5 = arith.addf %2, %4 : vector<16x128xf32>
    %cst_5 = arith.constant 0.000000e+00 : f32
    %6 = vector.broadcast %cst_5 : f32 to vector<16x128xf32>
    %7 = arith.maximumf %5, %6 : vector<16x128xf32>
    %c0_6 = arith.constant 0 : index
    %c0_7 = arith.constant 0 : index
    %8 = vector.load %arg4[%c0_6, %c0_7] : memref<128x10xf32, #tpu.memory_space<vmem>>, vector<128x10xf32>
    %cst_8 = arith.constant dense<0.000000e+00> : vector<16x10xf32>
    %9 = tpu.matmul %7, %8, %cst_8 {dimension_numbers = #tpu.dot_dimension_numbers<[1], [0], [0], [1], [0, 0, 1, 1], [], []>} : vector<16x128xf32>, vector<128x10xf32>, vector<16x10xf32> -> vector<16x10xf32>
    %c0_9 = arith.constant 0 : index
    %c0_10 = arith.constant 0 : index
    %10 = vector.load %arg5[%c0_9, %c0_10] : memref<1x10xf32, #tpu.memory_space<vmem>>, vector<1x10xf32>
    %11 = vector.broadcast %10 : vector<1x10xf32> to vector<16x10xf32>
    %12 = arith.addf %9, %11 : vector<16x10xf32>
    %c0_11 = arith.constant 0 : index
    %c0_12 = arith.constant 0 : index
    %13 = vector.load %arg6[%c0_11, %c0_12] : memref<16x10xf32, #tpu.memory_space<vmem>>, vector<16x10xf32>
    tpu.vector_store %arg6[%c0_11, %c0_12], %12 {strides = array<i32>} : memref<16x10xf32, #tpu.memory_space<vmem>>, vector<16x10xf32>,
    return
  }
  func.func @transform_0(%arg0: i32) -> (i32, i32) {
    %c0_i32 = arith.constant 0 : i32
    %c0_i32_0 = arith.constant 0 : i32
    return %arg0, %c0_i32 : i32, i32
  }
  func.func @transform_1(%arg0: i32) -> (i32, i32) {
    %c0_i32 = arith.constant 0 : i32
    %c0_i32_0 = arith.constant 0 : i32
    %c0_i32_1 = arith.constant 0 : i32
    return %c0_i32, %c0_i32_0 : i32, i32
  }
  func.func @transform_2(%arg0: i32) -> (i32, i32) {
    %c0_i32 = arith.constant 0 : i32
    %c0_i32_0 = arith.constant 0 : i32
    %c0_i32_1 = arith.constant 0 : i32
    return %c0_i32, %c0_i32_0 : i32, i32
  }
  func.func @transform_3(%arg0: i32) -> (i32, i32) {
    %c0_i32 = arith.constant 0 : i32
    %c0_i32_0 = arith.constant 0 : i32
    %c0_i32_1 = arith.constant 0 : i32
    return %c0_i32, %c0_i32_0 : i32, i32
  }
  func.func @transform_4(%arg0: i32) -> (i32, i32) {
    %c0_i32 = arith.constant 0 : i32
    %c0_i32_0 = arith.constant 0 : i32
    %c0_i32_1 = arith.constant 0 : i32
    return %c0_i32, %c0_i32_0 : i32, i32
  }
  func.func @transform_5(%arg0: i32) -> (i32, i32) {
    %c0_i32 = arith.constant 0 : i32
    %c0_i32_0 = arith.constant 0 : i32
    return %arg0, %c0_i32 : i32, i32
  }
}

</mosaic_0001>

<llo_original>
// kernel: tpu_custom_call.1
$region0: #{tpu_custom_call.1}
  #allocation0 [shape = 'u32[]', space=smem, size = 0x4, offset = 0x4, fixed_abs, tag = 'smem constant byte address 0x4 - core index']
  #allocation1 [shape = 'u32[144,128]{1,0:T(1,128)}', space=vmem, size = 0x12000, scoped, tag = 'internal scratch']
  %s0 = inlined_call_operand.vmem [shape: f32[16,10], index: 0, kind: input, shape index: {}]
  %s1 = inlined_call_operand.vmem [shape: f32[10,128], index: 1, kind: input, shape index: {}]
  %s2 = inlined_call_operand.vmem [shape: f32[1,128], index: 2, kind: input, shape index: {}]
  %s3 = inlined_call_operand.vmem [shape: f32[128,10], index: 3, kind: input, shape index: {}]
  %s4 = inlined_call_operand.vmem [shape: f32[1,10], index: 4, kind: input, shape index: {}]
  %s5 = inlined_call_operand.hbm [shape: f32[16,10], index: 5, kind: output, shape index: {}]
  %s6 = sld [smem:[#allocation0]]
  $region30: #{tpu_custom_call.1} parent=0
    _
  %s8 = ssub.s32 1, %s6
  %s9 = scalar_select 0, %s8, %s6
  $region1: #{tpu_custom_call.1} parent=0
    #allocation2 [shape = 'u8[8192]{0}', space=vmem, size = 0x2000, scoped, tag = 'output window, operand 0, single buffered']
    #allocation3 [shape = 's32[1]{0}', space=sflag, size = 0x4, scoped, tag = 'scoped memory for tpu_custom_call.1']
    %10 = vsyncpa [#allocation3], 0
    // Predicated region
    $region2: #{tpu_custom_call.1} parent=1 // pred_check
      _
    $region3: #{tpu_custom_call.1} parent=1 // pred_check_branch
      %12 = sbr.rel (0) target = $region5
    $region4: #{tpu_custom_call.1} parent=1 // pred_region
      _
    $region5: #{tpu_custom_call.1} parent=1 // pred_fallthru
      _
    // Predicated region
    $region6: #{tpu_custom_call.1} parent=1 // pred_check
      _
    $region7: #{tpu_custom_call.1} parent=1 // pred_check_branch
      %14 = sbr.rel (0) target = $region9
    $region8: #{tpu_custom_call.1} parent=1 // pred_region
      _
    $region9: #{tpu_custom_call.1} parent=1 // pred_fallthru
      _
    // Predicated region
    $region10: #{tpu_custom_call.1} parent=1 // pred_check
      _
    $region11: #{tpu_custom_call.1} parent=1 // pred_check_branch
      %16 = sbr.rel (0) target = $region13
    $region12: #{tpu_custom_call.1} parent=1 // pred_region
      _
    $region13: #{tpu_custom_call.1} parent=1 // pred_fallthru
      _
    // Predicated region
    $region14: #{tpu_custom_call.1} parent=1 // pred_check
      _
    $region15: #{tpu_custom_call.1} parent=1 // pred_check_branch
      %18 = sbr.rel (0) target = $region17
    $region16: #{tpu_custom_call.1} parent=1 // pred_region
      _
    $region17: #{tpu_custom_call.1} parent=1 // pred_fallthru
      _
    // Predicated region
    $region18: #{tpu_custom_call.1} parent=1 // pred_check
      _
    $region19: #{tpu_custom_call.1} parent=1 // pred_check_branch
      %20 = sbr.rel (0) target = $region21
    $region20: #{tpu_custom_call.1} parent=1 // pred_region
      _
    $region21: #{tpu_custom_call.1} parent=1 // pred_fallthru
      _
    %v21 = vld [vmem:[%s0] sm:$0xff]
    %v22 = vld [vmem:[%s0 + $0x8] sm:$0xff]
    %v23 = vld [vmem:[%s1] sm:$0xff]
    %v24 = vld [vmem:[%s1 + $0x8] sm:$0x3]
    %v25 = vld [vmem:[%s2] sm:$0x1]
    %v27 = vlaneseq
    %v28 = vshrl.u32 %v27, 7
    %v29 = vsub.s32 0, %v28
    %v30 = vrot.slane %v25, %v29
    %vm32 = vcmask 80896
    %v34 = vsel %vm32, %v21, 0
    %v37 = vsel %vm32, %v22, 0
    %vm39 = vcmask 1041408
    %v41 = vsel %vm39, %v24, 0
    %43 = vmatprep.subr.mxu0 0.0
    %44 = vmatpush1.msra.mxu0 %v23
    %45 = vmatprep.subr.mxu0 0.0
    %46 = vmatpush1.msra.mxu0 %v41
    %47 = vmatprep.subr.mxu0 0.0
    %48 = vmatpush1.msra.mxu0 0.0
    %49 = vmatprep.subr.mxu0 0.0
    %50 = vmatpush1.msra.mxu0 0.0
    %51 = vmatprep.subr.mxu0 0.0
    %52 = vmatpush1.msra.mxu0 0.0
    %53 = vmatprep.subr.mxu0 0.0
    %54 = vmatpush1.msra.mxu0 0.0
    %55 = vmatprep.subr.mxu0 0.0
    %56 = vmatpush1.msra.mxu0 0.0
    %57 = vmatprep.subr.mxu0 0.0
    %58 = vmatpush1.msra.mxu0 0.0
    %59 = vmatprep.subr.mxu0 0.0
    %60 = vmatpush1.msra.mxu0 0.0
    %61 = vmatprep.subr.mxu0 0.0
    %62 = vmatpush1.msra.mxu0 0.0
    %63 = vmatprep.subr.mxu0 0.0
    %64 = vmatpush1.msra.mxu0 0.0
    %65 = vmatprep.subr.mxu0 0.0
    %66 = vmatpush1.msra.mxu0 0.0
    %67 = vmatprep.subr.mxu0 0.0
    %68 = vmatpush1.msra.mxu0 0.0
    %69 = vmatprep.subr.mxu0 0.0
    %70 = vmatpush1.msra.mxu0 0.0
    %71 = vmatprep.subr.mxu0 0.0
    %72 = vmatpush1.msra.mxu0 0.0
    %73 = vmatprep.subr.mxu0 0.0
    %74 = vmatpush1.msra.mxu0 0.0
    %75 = vmatprep.subr.mxu0 0.0
    %76 = vmatpush1.msra.mxu0 0.0
    %77 = vmatprep.subr.mxu0 0.0
    %78 = vmatpush1.msra.mxu0 0.0
    %79 = vmatprep.subr.mxu0 0.0
    %80 = vmatpush1.msra.mxu0 0.0
    %81 = vmatprep.subr.mxu0 0.0
    %82 = vmatpush1.msra.mxu0 0.0
    %83 = vmatprep.subr.mxu0 0.0
    %84 = vmatpush1.msra.mxu0 0.0
    %85 = vmatprep.subr.mxu0 0.0
    %86 = vmatpush1.msra.mxu0 0.0
    %87 = vmatprep.subr.mxu0 0.0
    %88 = vmatpush1.msra.mxu0 0.0
    %89 = vmatprep.subr.mxu0 0.0
    %90 = vmatpush1.msra.mxu0 0.0
    %91 = vmatprep.subr.mxu0 0.0
    %92 = vmatpush1.msra.mxu0 0.0
    %93 = vmatprep.subr.mxu0 0.0
    %94 = vmatpush1.msra.mxu0 0.0
    %95 = vmatprep.subr.mxu0 0.0
    %96 = vmatpush1.msra.mxu0 0.0
    %97 = vmatprep.subr.mxu0 0.0
    %98 = vmatpush1.msra.mxu0 0.0
    %99 = vmatprep.subr.mxu0 0.0
    %100 = vmatpush1.msra.mxu0 0.0
    %101 = vmatprep.subr.mxu0 0.0
    %102 = vmatpush1.msra.mxu0 0.0
    %103 = vmatprep.subr.mxu0 0.0
    %104 = vmatpush1.msra.mxu0 0.0
    %105 = vmatprep.subr.mxu0 0.0
    %106 = vmatpush1.msra.mxu0 0.0
    %107 = vmatprep.mubr.f32.mxu0 0.0
    %108 = vmatmul.mubr.f32.gmra.mrb[0].mxu0 %v34
    %v109 = vpop.f32.mrb[0].mxu0
    %v110 = vadd.f32 %v30, %v109
    %v111 = vpop.f32.mrb[0].mxu0
    %112 = vmatprep.mubr.f32.mxu0 0.0
    %113 = vmatmul.mubr.f32.gmra.mrb[0].mxu0 %v37
    %v114 = vpop.f32.mrb[0].mxu0
    %v115 = vadd.f32 %v30, %v114
    %v116 = vpop.f32.mrb[0].mxu0
    %117 = vdwg.mxu0
    %v118 = vmax.f32 %v110, 0.0
    %v119 = vmax.f32 %v115, 0.0
    %v120 = vld [vmem:[%s3] sm:$0xff]
    %v121 = vld [vmem:[%s3 + $0x8] sm:$0xff]
    %v122 = vld [vmem:[%s3 + $0x10] sm:$0xff]
    %v123 = vld [vmem:[%s3 + $0x18] sm:$0xff]
    %v124 = vld [vmem:[%s3 + $0x20] sm:$0xff]
    %v125 = vld [vmem:[%s3 + $0x28] sm:$0xff]
    %v126 = vld [vmem:[%s3 + $0x30] sm:$0xff]
    %v127 = vld [vmem:[%s3 + $0x38] sm:$0xff]
    %v128 = vld [vmem:[%s3 + $0x40] sm:$0xff]
    %v129 = vld [vmem:[%s3 + $0x48] sm:$0xff]
    %v130 = vld [vmem:[%s3 + $0x50] sm:$0xff]
    %v131 = vld [vmem:[%s3 + $0x58] sm:$0xff]
    %v132 = vld [vmem:[%s3 + $0x60] sm:$0xff]
    %v133 = vld [vmem:[%s3 + $0x68] sm:$0xff]
    %v134 = vld [vmem:[%s3 + $0x70] sm:$0xff]
    %v135 = vld [vmem:[%s3 + $0x78] sm:$0xff]
    %v136 = vld [vmem:[%s4] sm:$0x1]
    %v138 = vlaneseq
    %v139 = vshrl.u32 %v138, 7
    %v140 = vsub.s32 0, %v139
    %v141 = vrot.slane %v136, %v140
    %143 = vmatprep.subr.mxu0 0.0
    %144 = vmatpush1.msra.mxu0 %v120
    %145 = vmatprep.subr.mxu0 0.0
    %146 = vmatpush1.msra.mxu0 %v121
    %147 = vmatprep.subr.mxu0 0.0
    %148 = vmatpush1.msra.mxu0 %v122
    %149 = vmatprep.subr.mxu0 0.0
    %150 = vmatpush1.msra.mxu0 %v123
    %151 = vmatprep.subr.mxu0 0.0
    %152 = vmatpush1.msra.mxu0 %v124
    %153 = vmatprep.subr.mxu0 0.0
    %154 = vmatpush1.msra.mxu0 %v125
    %155 = vmatprep.subr.mxu0 0.0
    %156 = vmatpush1.msra.mxu0 %v126
    %157 = vmatprep.subr.mxu0 0.0
    %158 = vmatpush1.msra.mxu0 %v127
    %159 = vmatprep.subr.mxu0 0.0
    %160 = vmatpush1.msra.mxu0 %v128
    %161 = vmatprep.subr.mxu0 0.0
    %162 = vmatpush1.msra.mxu0 %v129
    %163 = vmatprep.subr.mxu0 0.0
    %164 = vmatpush1.msra.mxu0 %v130
    %165 = vmatprep.subr.mxu0 0.0
    %166 = vmatpush1.msra.mxu0 %v131
    %167 = vmatprep.subr.mxu0 0.0
    %168 = vmatpush1.msra.mxu0 %v132
    %169 = vmatprep.subr.mxu0 0.0
    %170 = vmatpush1.msra.mxu0 %v133
    %171 = vmatprep.subr.mxu0 0.0
    %172 = vmatpush1.msra.mxu0 %v134
    %173 = vmatprep.subr.mxu0 0.0
    %174 = vmatpush1.msra.mxu0 %v135
    %175 = vmatprep.subr.mxu0 0.0
    %176 = vmatpush1.msra.mxu0 0.0
    %177 = vmatprep.subr.mxu0 0.0
    %178 = vmatpush1.msra.mxu0 0.0
    %179 = vmatprep.subr.mxu0 0.0
    %180 = vmatpush1.msra.mxu0 0.0
    %181 = vmatprep.subr.mxu0 0.0
    %182 = vmatpush1.msra.mxu0 0.0
    %183 = vmatprep.subr.mxu0 0.0
    %184 = vmatpush1.msra.mxu0 0.0
    %185 = vmatprep.subr.mxu0 0.0
    %186 = vmatpush1.msra.mxu0 0.0
    %187 = vmatprep.subr.mxu0 0.0
    %188 = vmatpush1.msra.mxu0 0.0
    %189 = vmatprep.subr.mxu0 0.0
    %190 = vmatpush1.msra.mxu0 0.0
    %191 = vmatprep.subr.mxu0 0.0
    %192 = vmatpush1.msra.mxu0 0.0
    %193 = vmatprep.subr.mxu0 0.0
    %194 = vmatpush1.msra.mxu0 0.0
    %195 = vmatprep.subr.mxu0 0.0
    %196 = vmatpush1.msra.mxu0 0.0
    %197 = vmatprep.subr.mxu0 0.0
    %198 = vmatpush1.msra.mxu0 0.0
    %199 = vmatprep.subr.mxu0 0.0
    %200 = vmatpush1.msra.mxu0 0.0
    %201 = vmatprep.subr.mxu0 0.0
    %202 = vmatpush1.msra.mxu0 0.0
    %203 = vmatprep.subr.mxu0 0.0
    %204 = vmatpush1.msra.mxu0 0.0
    %205 = vmatprep.subr.mxu0 0.0
    %206 = vmatpush1.msra.mxu0 0.0
    %207 = vmatprep.mubr.f32.mxu0 0.0
    %208 = vmatmul.mubr.f32.gmra.mrb[0].mxu0 %v118
    %v209 = vpop.f32.mrb[0].mxu0
    %v210 = vadd.f32 %v141, %v209
    %v211 = vpop.f32.mrb[0].mxu0
    %212 = vmatprep.mubr.f32.mxu0 0.0
    %213 = vmatmul.mubr.f32.gmra.mrb[0].mxu0 %v119
    %v214 = vpop.f32.mrb[0].mxu0
    %v215 = vadd.f32 %v141, %v214
    %v216 = vpop.f32.mrb[0].mxu0
    %217 = vdwg.mxu0
    %218 = vst.msk [vmem:[#allocation2] sm:$0xff] %vm32, %v210
    %219 = vst.msk [vmem:[#allocation2 + $0x8] sm:$0xff] %vm32, %v215
    // Predicated region
    $region22: #{tpu_custom_call.1} parent=1 // pred_check
      _
    $region23: #{tpu_custom_call.1} parent=1 // pred_check_branch
      %221 = sbr.rel (0) target = $region25
    $region24: #{tpu_custom_call.1} parent=1 // pred_region
      %s223 = ssub.s32 256, 256
      %224 = vsyncadd [#allocation3], %s223
      %s225 = sshll.u32 [#allocation2], 4
      %s226 = int_to_ptr.vmem [resolvable:$true] %s225
      %231 = dma.vmem_to_hbm [thread:$0]  %s226, 256, %s5, [#allocation3], 128, 128, 8
    $region25: #{tpu_custom_call.1} parent=1 // pred_fallthru
      _
    // Predicated region
    $region26: #{tpu_custom_call.1} parent=1 // pred_check
      _
    $region27: #{tpu_custom_call.1} parent=1 // pred_check_branch
      %233 = sbr.rel (0) target = $region29
    $region28: #{tpu_custom_call.1} parent=1 // pred_region
      %234 = dma.done [#allocation3], 256
    $region29: #{tpu_custom_call.1} parent=1 // pred_fallthru
      _
    %235 = vsyncpa [#allocation3], 1

</llo_original>
